<compile_context>
chip_gen: v5e
topology: v5e:2x2
jax: 0.10.0
libtpu: 0.0.40
codegen_flags: <defaults>
</compile_context>

<pallas_src>
import functools

import jax
import jax.numpy as jnp
from jax.experimental import pallas as pl
from jax.experimental.pallas import tpu as pltpu


def _conv3x3_to_banded(w_hwio, W):
    """Fold the kw (width) taps and the zero padding along W of a 3x3/stride-1
    conv into three banded block matrices B[kh] of shape (W*Cin, W*Cout):

        out_row(n, h') = sum_kh  act_row(n, h' + kh - 1) @ B[kh]

    Rows live in the fused (W*C) lane layout; out-of-range H rows are zero
    (supplied by the halo scratch inside the kernel)."""
    KH, KW, Cin, Cout = w_hwio.shape
    mats = []
    for kh in range(KH):
        bk = jnp.zeros((W * Cin, W * Cout), jnp.float32)
        for kw in range(KW):
            dw = kw - 1
            # shift[wi, wp] = 1 iff wi == wp + dw ; missing entries at the W
            # boundary implement the conv's zero padding along W.
            shift = jnp.eye(W, W, k=-dw, dtype=jnp.float32)
            bk = bk + jnp.kron(shift, w_hwio[kh, kw])
        mats.append(bk)
    return jnp.stack(mats).astype(jnp.bfloat16)           # (3, W*Cin, W*Cout)


def wrn_block_kernel(x_ref, w1_ref, w2_ref, t_ref, g1_ref, b1_ref,
                     g2_ref, b2_ref, o_ref, pad_ref, *, eps, N, H, W, C):
    WC = W * C
    NH = N * H
    x = x_ref[...]                                         # (N*H, W*C) f32

    def bn_relu(v, gamma_t, beta_t):
        # One-pass BatchNorm statistics (biased variance, training mode).
        s1 = jnp.sum(v, axis=0, keepdims=True)             # (1, WC)
        s2 = jnp.sum(v * v, axis=0, keepdims=True)         # (1, WC)
        # Channel-mixing matmul: sums the W copies of each channel and tiles
        # the per-channel statistic back across the fused W*C lane axis.
        mean = jnp.dot(s1, t_ref[...], preferred_element_type=jnp.float32)
        ex2 = jnp.dot(s2, t_ref[...], preferred_element_type=jnp.float32)
        var = ex2 - mean * mean
        scale = gamma_t * jax.lax.rsqrt(var + eps)          # (1, WC)
        shift = beta_t - mean * scale
        return jnp.maximum(v * scale + shift, 0.0)          # lane-dense VPU

    def conv3x3(v, w_ref):
        # v: (N*H, W*C).  Stage into the shared H-halo scratch (halo rows stay
        # zero) and run 3 lane-dense bf16 MXU matmuls, one per kh tap.
        pad_ref[:, 1:1 + H, :] = v.reshape(N, H, WC)
        acc = jnp.zeros((NH, WC), jnp.float32)
        for kh in range(3):
            lhs = pad_ref[:, kh:kh + H, :].reshape(NH, WC).astype(jnp.bfloat16)
            acc = acc + jnp.dot(lhs, w_ref[kh],
                                preferred_element_type=jnp.float32)
        return acc

    # Zero only the two halo rows, once, shared by both convs (the interior is
    # fully overwritten by each conv's staging store).
    zero_row = jnp.zeros((N, 1, WC), jnp.float32)
    pad_ref[:, 0:1, :] = zero_row
    pad_ref[:, H + 1:H + 2, :] = zero_row

    h = bn_relu(x, g1_ref[...], b1_ref[...])               # relu(bn1(x))
    h = conv3x3(h, w1_ref)                                 # layer1 (3x3)
    h = bn_relu(h, g2_ref[...], b2_ref[...])               # relu(bn2(.))
    h = conv3x3(h, w2_ref)                                 # conv2  (3x3)
    o_ref[...] = x + h                                     # identity shortcut


def wrn_basic_block(x, w1, w2, g1, b1, g2, b2, eps=1e-5):
    """x: (N,H,W,C) f32 NHWC; w1,w2: (3,3,C,C) HWIO (Cin==Cout==C);
    g*/b*: (C,) BatchNorm affine parameters.  Returns (N,H,W,C) f32."""
    N, H, W, C = x.shape
    assert w1.shape == (3, 3, C, C) and w2.shape == (3, 3, C, C)
    WC, NH = W * C, N * H

    # Lane-dense presentation: fuse (W, C) into one trailing axis (here 128).
    x2d = x.reshape(NH, WC)
    w1b = _conv3x3_to_banded(w1, W)                        # (3, WC, WC) bf16
    w2b = _conv3x3_to_banded(w2, W)

    # T[i, j] = 1/(N*H*W) iff lanes i and j hold the same channel, so
    # (row_sums @ T) is the per-channel mean tiled across the W*C lanes.
    lane = jnp.arange(WC)
    t_mat = ((lane[:, None] % C) == (lane[None, :] % C)).astype(jnp.float32)
    t_mat = t_mat / float(N * H * W)

    def tile_c(p):                                         # (C,) -> (1, W*C)
        return jnp.tile(jnp.asarray(p, jnp.float32).reshape(1, C), (1, W))

    kern = functools.partial(wrn_block_kernel, eps=float(eps),
                             N=N, H=H, W=W, C=C)
    vm = pltpu.MemorySpace.VMEM
    flops = 2 * (2 * 3 * NH * WC * WC)                     # 2 convs x 3 matmuls
    bytes_accessed = 4 * (2 * NH * WC + WC * WC) + 2 * (2 * 3 * WC * WC)

    out2d = pl.pallas_call(
        kern,
        out_shape=jax.ShapeDtypeStruct((NH, WC), jnp.float32),
        in_specs=[pl.BlockSpec(memory_space=vm)] * 8,
        out_specs=pl.BlockSpec(memory_space=vm),
        scratch_shapes=[pltpu.VMEM((N, H + 2, WC), jnp.float32)],
        compiler_params=pltpu.CompilerParams(
            vmem_limit_bytes=32 * 1024 * 1024),
        cost_estimate=pl.CostEstimate(flops=flops, transcendentals=0,
                                      bytes_accessed=bytes_accessed),
    )(x2d, w1b, w2b, t_mat, tile_c(g1), tile_c(b1), tile_c(g2), tile_c(b2))
    return out2d.reshape(N, H, W, C)


def reference(x, w1, w2, g1, b1, g2, b2, eps=1e-5, conv_dtype=jnp.float32):
    """Pure-JAX NHWC reference of the same forward pass."""
    def bn_relu(t, g, b):
        m = jnp.mean(t, axis=(0, 1, 2), keepdims=True)
        v = jnp.mean((t - m) ** 2, axis=(0, 1, 2), keepdims=True)
        return jnp.maximum(
            (t - m) * jax.lax.rsqrt(v + eps) * g.reshape(1, 1, 1, -1)
            + b.reshape(1, 1, 1, -1), 0.0)

    def conv(t, w):
        return jax.lax.conv_general_dilated(
            t.astype(conv_dtype), w.astype(conv_dtype),
            window_strides=(1, 1), padding="SAME",
            dimension_numbers=("NHWC", "HWIO", "NHWC"),
            preferred_element_type=jnp.float32)

    h = bn_relu(x, g1, b1)
    h = conv(h, w1)
    h = bn_relu(h, g2, b2)
    h = conv(h, w2)
    return x + h


if __name__ == "__main__":
    # Small shapes consistent with the module: in_planes == out_planes == 8,
    # stride=1 -> identity shortcut.  PyTorch input would be NCHW (2, 8, 16, 16);
    # we build it directly in NHWC.  W*C = 128 -> fully lane-dense kernel layout.
    N, H, W, C = 2, 16, 16, 8
    eps = 1e-5

    key = jax.random.PRNGKey(0)
    k_x, k_w1, k_w2, k_g1, k_b1, k_g2, k_b2 = jax.random.split(key, 7)

    x = jax.random.normal(k_x, (N, H, W, C), dtype=jnp.float32)
    # Conv weights in HWIO (PyTorch OIHW transposed to (2, 3, 1, 0)).
    w1 = jax.random.normal(k_w1, (3, 3, C, C), dtype=jnp.float32) * 0.1
    w2 = jax.random.normal(k_w2, (3, 3, C, C), dtype=jnp.float32) * 0.1
    # BN affine params (PyTorch inits gamma=1, beta=0; perturb for a real test).
    g1 = 1.0 + 0.1 * jax.random.normal(k_g1, (C,), dtype=jnp.float32)
    b1 = 0.1 * jax.random.normal(k_b1, (C,), dtype=jnp.float32)
    g2 = 1.0 + 0.1 * jax.random.normal(k_g2, (C,), dtype=jnp.float32)
    b2 = 0.1 * jax.random.normal(k_b2, (C,), dtype=jnp.float32)

    out = jax.block_until_ready(wrn_basic_block(x, w1, w2, g1, b1, g2, b2, eps=eps))
    assert out.shape == (N, H, W, C)

    # Tight check against a reference that also uses bf16 conv operands
    # (same numerics as the kernel's MXU path) ...
    ref_bf16 = jax.block_until_ready(
        reference(x, w1, w2, g1, b1, g2, b2, eps=eps, conv_dtype=jnp.bfloat16))
    err_bf16 = float(jnp.max(jnp.abs(out - ref_bf16)))
    assert err_bf16 < 1e-2, f"mismatch vs bf16-matmul reference: {err_bf16}"

    # ... plus a sanity check against the full-f32 reference (slack accounts
    # for the intentional bf16 rounding of the MXU operands).
    ref_f32 = jax.block_until_ready(
        reference(x, w1, w2, g1, b1, g2, b2, eps=eps, conv_dtype=jnp.float32))
    err_f32 = float(jnp.max(jnp.abs(out - ref_f32)))
    assert err_f32 < 5e-2, f"mismatch vs f32 reference: {err_f32}"

    print("KERNEL_OK")
</pallas_src>

<mosaic_0001>
module attributes {stable_mosaic.version = 11 : i64} {
  func.func @wrn_block_kernel(%arg0: memref<32x128xf32, #tpu.memory_space<vmem>>, %arg1: memref<3x128x128xbf16, #tpu.memory_space<vmem>>, %arg2: memref<3x128x128xbf16, #tpu.memory_space<vmem>>, %arg3: memref<128x128xf32, #tpu.memory_space<vmem>>, %arg4: memref<1x128xf32, #tpu.memory_space<vmem>>, %arg5: memref<1x128xf32, #tpu.memory_space<vmem>>, %arg6: memref<1x128xf32, #tpu.memory_space<vmem>>, %arg7: memref<1x128xf32, #tpu.memory_space<vmem>>, %arg8: memref<32x128xf32, #tpu.memory_space<vmem>>, %arg9: memref<2x18x128xf32, #tpu.memory_space<vmem>>) attributes {dimension_semantics = [], scalar_prefetch = 0 : i64, scratch_operands = 1 : i64, tpu.core_type = #tpu.core_type<tc>} {
    %c0 = arith.constant 0 : index
    %c0_0 = arith.constant 0 : index
    %0 = vector.load %arg0[%c0, %c0_0] : memref<32x128xf32, #tpu.memory_space<vmem>>, vector<32x128xf32>
    %cst = arith.constant 0.000000e+00 : f32
    %1 = vector.broadcast %cst : f32 to vector<2x1x128xf32>
    %c0_1 = arith.constant 0 : index
    %c0_2 = arith.constant 0 : index
    %c0_3 = arith.constant 0 : index
    %2 = vector.load %arg9[%c0_1, %c0_2, %c0_3] : memref<2x18x128xf32, #tpu.memory_space<vmem>>, vector<2x1x128xf32>
    tpu.vector_store %arg9[%c0_1, %c0_2, %c0_3], %1 {strides = array<i32>} : memref<2x18x128xf32, #tpu.memory_space<vmem>>, vector<2x1x128xf32>,
    %c0_4 = arith.constant 0 : index
    %c17 = arith.constant 17 : index
    %c0_5 = arith.constant 0 : index
    %3 = vector.load %arg9[%c0_4, %c17, %c0_5] : memref<2x18x128xf32, #tpu.memory_space<vmem>>, vector<2x1x128xf32>
    tpu.vector_store %arg9[%c0_4, %c17, %c0_5], %1 {strides = array<i32>} : memref<2x18x128xf32, #tpu.memory_space<vmem>>, vector<2x1x128xf32>,
    %c0_6 = arith.constant 0 : index
    %c0_7 = arith.constant 0 : index
    %4 = vector.load %arg4[%c0_6, %c0_7] : memref<1x128xf32, #tpu.memory_space<vmem>>, vector<1x128xf32>
    %c0_8 = arith.constant 0 : index
    %c0_9 = arith.constant 0 : index
    %5 = vector.load %arg5[%c0_8, %c0_9] : memref<1x128xf32, #tpu.memory_space<vmem>>, vector<1x128xf32>
    %cst_10 = arith.constant dense<0.000000e+00> : vector<128xf32>
    %6 = vector.multi_reduction <add>, %0, %cst_10 [0] : vector<32x128xf32> to vector<128xf32>
    %7 = vector.shape_cast %6 : vector<128xf32> to vector<1x128xf32>
    %8 = arith.mulf %0, %0 : vector<32x128xf32>
    %cst_11 = arith.constant dense<0.000000e+00> : vector<128xf32>
    %9 = vector.multi_reduction <add>, %8, %cst_11 [0] : vector<32x128xf32> to vector<128xf32>
    %10 = vector.shape_cast %9 : vector<128xf32> to vector<1x128xf32>
    %c0_12 = arith.constant 0 : index
    %c0_13 = arith.constant 0 : index
    %11 = vector.load %arg3[%c0_12, %c0_13] : memref<128x128xf32, #tpu.memory_space<vmem>>, vector<128x128xf32>
    %cst_14 = arith.constant dense<0.000000e+00> : vector<1x128xf32>
    %12 = tpu.matmul %7, %11, %cst_14 {dimension_numbers = #tpu.dot_dimension_numbers<[1], [0], [0], [1], [0, 0, 1, 1], [], []>} : vector<1x128xf32>, vector<128x128xf32>, vector<1x128xf32> -> vector<1x128xf32>
    %c0_15 = arith.constant 0 : index
    %c0_16 = arith.constant 0 : index
    %13 = vector.load %arg3[%c0_15, %c0_16] : memref<128x128xf32, #tpu.memory_space<vmem>>, vector<128x128xf32>
    %cst_17 = arith.constant dense<0.000000e+00> : vector<1x128xf32>
    %14 = tpu.matmul %10, %13, %cst_17 {dimension_numbers = #tpu.dot_dimension_numbers<[1], [0], [0], [1], [0, 0, 1, 1], [], []>} : vector<1x128xf32>, vector<128x128xf32>, vector<1x128xf32> -> vector<1x128xf32>
    %15 = arith.mulf %12, %12 : vector<1x128xf32>
    %16 = arith.subf %14, %15 : vector<1x128xf32>
    %cst_18 = arith.constant 9.99999974E-6 : f32
    %17 = vector.broadcast %cst_18 : f32 to vector<1x128xf32>
    %18 = arith.addf %16, %17 : vector<1x128xf32>
    %19 = math.rsqrt %18 : vector<1x128xf32>
    %20 = arith.mulf %4, %19 : vector<1x128xf32>
    %21 = arith.mulf %12, %20 : vector<1x128xf32>
    %22 = arith.subf %5, %21 : vector<1x128xf32>
    %23 = vector.broadcast %20 : vector<1x128xf32> to vector<32x128xf32>
    %24 = arith.mulf %0, %23 : vector<32x128xf32>
    %25 = vector.broadcast %22 : vector<1x128xf32> to vector<32x128xf32>
    %26 = arith.addf %24, %25 : vector<32x128xf32>
    %cst_19 = arith.constant 0.000000e+00 : f32
    %27 = vector.broadcast %cst_19 : f32 to vector<32x128xf32>
    %28 = arith.maximumf %26, %27 : vector<32x128xf32>
    %29 = vector.shape_cast %28 : vector<32x128xf32> to vector<2x16x128xf32>
    %c0_20 = arith.constant 0 : index
    %c1 = arith.constant 1 : index
    %c0_21 = arith.constant 0 : index
    %30 = vector.load %arg9[%c0_20, %c1, %c0_21] : memref<2x18x128xf32, #tpu.memory_space<vmem>>, vector<2x16x128xf32>
    tpu.vector_store %arg9[%c0_20, %c1, %c0_21], %29 {strides = array<i32>} : memref<2x18x128xf32, #tpu.memory_space<vmem>>, vector<2x16x128xf32>,
    %cst_22 = arith.constant 0.000000e+00 : f32
    %31 = vector.broadcast %cst_22 : f32 to vector<32x128xf32>
    %c0_23 = arith.constant 0 : index
    %c0_24 = arith.constant 0 : index
    %c0_25 = arith.constant 0 : index
    %32 = vector.load %arg9[%c0_23, %c0_24, %c0_25] : memref<2x18x128xf32, #tpu.memory_space<vmem>>, vector<2x16x128xf32>
    %33 = vector.shape_cast %32 : vector<2x16x128xf32> to vector<32x128xf32>
    %34 = arith.truncf %33 : vector<32x128xf32> to vector<32x128xbf16>
    %c0_26 = arith.constant 0 : index
    %c0_27 = arith.constant 0 : index
    %c0_28 = arith.constant 0 : index
    %35 = vector.load %arg1[%c0_26, %c0_27, %c0_28] : memref<3x128x128xbf16, #tpu.memory_space<vmem>>, vector<1x128x128xbf16>
    %36 = vector.shape_cast %35 : vector<1x128x128xbf16> to vector<128x128xbf16>
    %cst_29 = arith.constant dense<0.000000e+00> : vector<32x128xf32>
    %37 = tpu.matmul %34, %36, %cst_29 {dimension_numbers = #tpu.dot_dimension_numbers<[1], [0], [0], [1], [0, 0, 1, 1], [], []>} : vector<32x128xbf16>, vector<128x128xbf16>, vector<32x128xf32> -> vector<32x128xf32>
    %38 = arith.addf %31, %37 : vector<32x128xf32>
    %c0_30 = arith.constant 0 : index
    %c1_31 = arith.constant 1 : index
    %c0_32 = arith.constant 0 : index
    %39 = vector.load %arg9[%c0_30, %c1_31, %c0_32] : memref<2x18x128xf32, #tpu.memory_space<vmem>>, vector<2x16x128xf32>
    %40 = vector.shape_cast %39 : vector<2x16x128xf32> to vector<32x128xf32>
    %41 = arith.truncf %40 : vector<32x128xf32> to vector<32x128xbf16>
    %c1_33 = arith.constant 1 : index
    %c0_34 = arith.constant 0 : index
    %c0_35 = arith.constant 0 : index
    %42 = vector.load %arg1[%c1_33, %c0_34, %c0_35] : memref<3x128x128xbf16, #tpu.memory_space<vmem>>, vector<1x128x128xbf16>
    %43 = vector.shape_cast %42 : vector<1x128x128xbf16> to vector<128x128xbf16>
    %cst_36 = arith.constant dense<0.000000e+00> : vector<32x128xf32>
    %44 = tpu.matmul %41, %43, %cst_36 {dimension_numbers = #tpu.dot_dimension_numbers<[1], [0], [0], [1], [0, 0, 1, 1], [], []>} : vector<32x128xbf16>, vector<128x128xbf16>, vector<32x128xf32> -> vector<32x128xf32>
    %45 = arith.addf %38, %44 : vector<32x128xf32>
    %c0_37 = arith.constant 0 : index
    %c2 = arith.constant 2 : index
    %c0_38 = arith.constant 0 : index
    %46 = vector.load %arg9[%c0_37, %c2, %c0_38] : memref<2x18x128xf32, #tpu.memory_space<vmem>>, vector<2x16x128xf32>
    %47 = vector.shape_cast %46 : vector<2x16x128xf32> to vector<32x128xf32>
    %48 = arith.truncf %47 : vector<32x128xf32> to vector<32x128xbf16>
    %c2_39 = arith.constant 2 : index
    %c0_40 = arith.constant 0 : index
    %c0_41 = arith.constant 0 : index
    %49 = vector.load %arg1[%c2_39, %c0_40, %c0_41] : memref<3x128x128xbf16, #tpu.memory_space<vmem>>, vector<1x128x128xbf16>
    %50 = vector.shape_cast %49 : vector<1x128x128xbf16> to vector<128x128xbf16>
    %cst_42 = arith.constant dense<0.000000e+00> : vector<32x128xf32>
    %51 = tpu.matmul %48, %50, %cst_42 {dimension_numbers = #tpu.dot_dimension_numbers<[1], [0], [0], [1], [0, 0, 1, 1], [], []>} : vector<32x128xbf16>, vector<128x128xbf16>, vector<32x128xf32> -> vector<32x128xf32>
    %52 = arith.addf %45, %51 : vector<32x128xf32>
    %c0_43 = arith.constant 0 : index
    %c0_44 = arith.constant 0 : index
    %53 = vector.load %arg6[%c0_43, %c0_44] : memref<1x128xf32, #tpu.memory_space<vmem>>, vector<1x128xf32>
    %c0_45 = arith.constant 0 : index
    %c0_46 = arith.constant 0 : index
    %54 = vector.load %arg7[%c0_45, %c0_46] : memref<1x128xf32, #tpu.memory_space<vmem>>, vector<1x128xf32>
    %cst_47 = arith.constant dense<0.000000e+00> : vector<128xf32>
    %55 = vector.multi_reduction <add>, %52, %cst_47 [0] : vector<32x128xf32> to vector<128xf32>
    %56 = vector.shape_cast %55 : vector<128xf32> to vector<1x128xf32>
    %57 = arith.mulf %52, %52 : vector<32x128xf32>
    %cst_48 = arith.constant dense<0.000000e+00> : vector<128xf32>
    %58 = vector.multi_reduction <add>, %57, %cst_48 [0] : vector<32x128xf32> to vector<128xf32>
    %59 = vector.shape_cast %58 : vector<128xf32> to vector<1x128xf32>
    %c0_49 = arith.constant 0 : index
    %c0_50 = arith.constant 0 : index
    %60 = vector.load %arg3[%c0_49, %c0_50] : memref<128x128xf32, #tpu.memory_space<vmem>>, vector<128x128xf32>
    %cst_51 = arith.constant dense<0.000000e+00> : vector<1x128xf32>
    %61 = tpu.matmul %56, %60, %cst_51 {dimension_numbers = #tpu.dot_dimension_numbers<[1], [0], [0], [1], [0, 0, 1, 1], [], []>} : vector<1x128xf32>, vector<128x128xf32>, vector<1x128xf32> -> vector<1x128xf32>
    %c0_52 = arith.constant 0 : index
    %c0_53 = arith.constant 0 : index
    %62 = vector.load %arg3[%c0_52, %c0_53] : memref<128x128xf32, #tpu.memory_space<vmem>>, vector<128x128xf32>
    %cst_54 = arith.constant dense<0.000000e+00> : vector<1x128xf32>
    %63 = tpu.matmul %59, %62, %cst_54 {dimension_numbers = #tpu.dot_dimension_numbers<[1], [0], [0], [1], [0, 0, 1, 1], [], []>} : vector<1x128xf32>, vector<128x128xf32>, vector<1x128xf32> -> vector<1x128xf32>
    %64 = arith.mulf %61, %61 : vector<1x128xf32>
    %65 = arith.subf %63, %64 : vector<1x128xf32>
    %cst_55 = arith.constant 9.99999974E-6 : f32
    %66 = vector.broadcast %cst_55 : f32 to vector<1x128xf32>
    %67 = arith.addf %65, %66 : vector<1x128xf32>
    %68 = math.rsqrt %67 : vector<1x128xf32>
    %69 = arith.mulf %53, %68 : vector<1x128xf32>
    %70 = arith.mulf %61, %69 : vector<1x128xf32>
    %71 = arith.subf %54, %70 : vector<1x128xf32>
    %72 = vector.broadcast %69 : vector<1x128xf32> to vector<32x128xf32>
    %73 = arith.mulf %52, %72 : vector<32x128xf32>
    %74 = vector.broadcast %71 : vector<1x128xf32> to vector<32x128xf32>
    %75 = arith.addf %73, %74 : vector<32x128xf32>
    %cst_56 = arith.constant 0.000000e+00 : f32
    %76 = vector.broadcast %cst_56 : f32 to vector<32x128xf32>
    %77 = arith.maximumf %75, %76 : vector<32x128xf32>
    %78 = vector.shape_cast %77 : vector<32x128xf32> to vector<2x16x128xf32>
    %c0_57 = arith.constant 0 : index
    %c1_58 = arith.constant 1 : index
    %c0_59 = arith.constant 0 : index
    %79 = vector.load %arg9[%c0_57, %c1_58, %c0_59] : memref<2x18x128xf32, #tpu.memory_space<vmem>>, vector<2x16x128xf32>
    tpu.vector_store %arg9[%c0_57, %c1_58, %c0_59], %78 {strides = array<i32>} : memref<2x18x128xf32, #tpu.memory_space<vmem>>, vector<2x16x128xf32>,
    %cst_60 = arith.constant 0.000000e+00 : f32
    %80 = vector.broadcast %cst_60 : f32 to vector<32x128xf32>
    %c0_61 = arith.constant 0 : index
    %c0_62 = arith.constant 0 : index
    %c0_63 = arith.constant 0 : index
    %81 = vector.load %arg9[%c0_61, %c0_62, %c0_63] : memref<2x18x128xf32, #tpu.memory_space<vmem>>, vector<2x16x128xf32>
    %82 = vector.shape_cast %81 : vector<2x16x128xf32> to vector<32x128xf32>
    %83 = arith.truncf %82 : vector<32x128xf32> to vector<32x128xbf16>
    %c0_64 = arith.constant 0 : index
    %c0_65 = arith.constant 0 : index
    %c0_66 = arith.constant 0 : index
    %84 = vector.load %arg2[%c0_64, %c0_65, %c0_66] : memref<3x128x128xbf16, #tpu.memory_space<vmem>>, vector<1x128x128xbf16>
    %85 = vector.shape_cast %84 : vector<1x128x128xbf16> to vector<128x128xbf16>
    %cst_67 = arith.constant dense<0.000000e+00> : vector<32x128xf32>
    %86 = tpu.matmul %83, %85, %cst_67 {dimension_numbers = #tpu.dot_dimension_numbers<[1], [0], [0], [1], [0, 0, 1, 1], [], []>} : vector<32x128xbf16>, vector<128x128xbf16>, vector<32x128xf32> -> vector<32x128xf32>
    %87 = arith.addf %80, %86 : vector<32x128xf32>
    %c0_68 = arith.constant 0 : index
    %c1_69 = arith.constant 1 : index
    %c0_70 = arith.constant 0 : index
    %88 = vector.load %arg9[%c0_68, %c1_69, %c0_70] : memref<2x18x128xf32, #tpu.memory_space<vmem>>, vector<2x16x128xf32>
    %89 = vector.shape_cast %88 : vector<2x16x128xf32> to vector<32x128xf32>
    %90 = arith.truncf %89 : vector<32x128xf32> to vector<32x128xbf16>
    %c1_71 = arith.constant 1 : index
    %c0_72 = arith.constant 0 : index
    %c0_73 = arith.constant 0 : index
    %91 = vector.load %arg2[%c1_71, %c0_72, %c0_73] : memref<3x128x128xbf16, #tpu.memory_space<vmem>>, vector<1x128x128xbf16>
    %92 = vector.shape_cast %91 : vector<1x128x128xbf16> to vector<128x128xbf16>
    %cst_74 = arith.constant dense<0.000000e+00> : vector<32x128xf32>
    %93 = tpu.matmul %90, %92, %cst_74 {dimension_numbers = #tpu.dot_dimension_numbers<[1], [0], [0], [1], [0, 0, 1, 1], [], []>} : vector<32x128xbf16>, vector<128x128xbf16>, vector<32x128xf32> -> vector<32x128xf32>
    %94 = arith.addf %87, %93 : vector<32x128xf32>
    %c0_75 = arith.constant 0 : index
    %c2_76 = arith.constant 2 : index
    %c0_77 = arith.constant 0 : index
    %95 = vector.load %arg9[%c0_75, %c2_76, %c0_77] : memref<2x18x128xf32, #tpu.memory_space<vmem>>, vector<2x16x128xf32>
    %96 = vector.shape_cast %95 : vector<2x16x128xf32> to vector<32x128xf32>
    %97 = arith.truncf %96 : vector<32x128xf32> to vector<32x128xbf16>
    %c2_78 = arith.constant 2 : index
    %c0_79 = arith.constant 0 : index
    %c0_80 = arith.constant 0 : index
    %98 = vector.load %arg2[%c2_78, %c0_79, %c0_80] : memref<3x128x128xbf16, #tpu.memory_space<vmem>>, vector<1x128x128xbf16>
    %99 = vector.shape_cast %98 : vector<1x128x128xbf16> to vector<128x128xbf16>
    %cst_81 = arith.constant dense<0.000000e+00> : vector<32x128xf32>
    %100 = tpu.matmul %97, %99, %cst_81 {dimension_numbers = #tpu.dot_dimension_numbers<[1], [0], [0], [1], [0, 0, 1, 1], [], []>} : vector<32x128xbf16>, vector<128x128xbf16>, vector<32x128xf32> -> vector<32x128xf32>
    %101 = arith.addf %94, %100 : vector<32x128xf32>
    %102 = arith.addf %0, %101 : vector<32x128xf32>
    %c0_82 = arith.constant 0 : index
    %c0_83 = arith.constant 0 : index
    %103 = vector.load %arg8[%c0_82, %c0_83] : memref<32x128xf32, #tpu.memory_space<vmem>>, vector<32x128xf32>
    tpu.vector_store %arg8[%c0_82, %c0_83], %102 {strides = array<i32>} : memref<32x128xf32, #tpu.memory_space<vmem>>, vector<32x128xf32>,
    return
  }
}

</mosaic_0001>

<llo_original>
// kernel: tpu_custom_call.1
$region0: #{tpu_custom_call.1}
  #allocation0 [shape = 'u32[]', space=smem, size = 0x4, offset = 0x4, fixed_abs, tag = 'smem constant byte address 0x4 - core index']
  #allocation1 [shape = 'u32[72,128]{1,0:T(1,128)}', space=vmem, size = 0x9000, scoped, tag = 'internal scratch']
  #allocation2 [shape = 'f32[2,18,128]{2,1,0:T(8,128)}', space=vmem, size = 0x6000, scoped, tag = 'scratch operand']
  %s0 = inlined_call_operand.hbm [shape: f32[32,128], index: 0, kind: input, shape index: {}]
  %s1 = inlined_call_operand.hbm [shape: bf16[3,128,128], index: 1, kind: input, shape index: {}]
  %s2 = inlined_call_operand.hbm [shape: bf16[3,128,128], index: 2, kind: input, shape index: {}]
  %s3 = inlined_call_operand.hbm [shape: f32[128,128], index: 3, kind: input, shape index: {}]
  %s4 = inlined_call_operand.vmem [shape: f32[1,128], index: 4, kind: input, shape index: {}]
  %s5 = inlined_call_operand.vmem [shape: f32[1,128], index: 5, kind: input, shape index: {}]
  %s6 = inlined_call_operand.vmem [shape: f32[1,128], index: 6, kind: input, shape index: {}]
  %s7 = inlined_call_operand.vmem [shape: f32[1,128], index: 7, kind: input, shape index: {}]
  %s8 = inlined_call_operand.hbm [shape: f32[32,128], index: 8, kind: output, shape index: {}]
  %s9 = sld [smem:[#allocation0]]
  $region58: #{tpu_custom_call.1} parent=0
    _
  %s11 = ssub.s32 1, %s9
  %s12 = scalar_select 0, %s11, %s9
  $region1: #{tpu_custom_call.1} parent=0
    #allocation3 [shape = 'u8[16384]{0}', space=vmem, size = 0x4000, scoped, tag = 'input window, operand 0, single buffered']
    #allocation4 [shape = 's32[1]{0}', space=sflag, size = 0x4, scoped, tag = 'scoped memory for tpu_custom_call.1']
    #allocation5 [shape = 's32[1]{0}', space=sflag, size = 0x4, scoped, tag = 'scoped memory for tpu_custom_call.1']
    #allocation6 [shape = 'u8[98304]{0}', space=vmem, size = 0x18000, scoped, tag = 'input window, operand 1, single buffered']
    #allocation7 [shape = 's32[1]{0}', space=sflag, size = 0x4, scoped, tag = 'scoped memory for tpu_custom_call.1']
    #allocation8 [shape = 'u8[98304]{0}', space=vmem, size = 0x18000, scoped, tag = 'input window, operand 2, single buffered']
    #allocation9 [shape = 'u8[65536]{0}', space=vmem, size = 0x10000, scoped, tag = 'input window, operand 3, single buffered']
    #allocation10 [shape = 's32[1]{0}', space=sflag, size = 0x4, scoped, tag = 'scoped memory for tpu_custom_call.1']
    #allocation11 [shape = 'u8[16384]{0}', space=vmem, size = 0x4000, scoped, tag = 'output window, operand 0, single buffered']
    %13 = vsyncpa [#allocation4], 0
    %14 = vsyncpa [#allocation7], 0
    %15 = vsyncpa [#allocation10], 0
    %16 = vsyncpa [#allocation5], 0
    // Predicated region
    $region2: #{tpu_custom_call.1} parent=1 // pred_check
      _
    $region3: #{tpu_custom_call.1} parent=1 // pred_check_branch
      %18 = sbr.rel (0) target = $region5
    $region4: #{tpu_custom_call.1} parent=1 // pred_region
      %20 = vsyncadd [#allocation4], 0
      %s21 = sshll.u32 %s0, 4
      %s22 = int_to_ptr.hbm [resolvable:$true] %s21
      %s23 = sshll.u32 [#allocation3], 4
      %s24 = int_to_ptr.vmem [resolvable:$true] %s23
      %29 = dma.hbm_to_vmem [thread:$0]  %s22, 512, %s24, [#allocation4], 128, 128, 8
    $region5: #{tpu_custom_call.1} parent=1 // pred_fallthru
      _
    // Predicated region
    $region6: #{tpu_custom_call.1} parent=1 // pred_check
      _
    $region7: #{tpu_custom_call.1} parent=1 // pred_check_branch
      %31 = sbr.rel (0) target = $region9
    $region8: #{tpu_custom_call.1} parent=1 // pred_region
      %33 = vsyncadd [#allocation7], 0
      %s34 = sshll.u32 %s1, 4
      %s35 = int_to_ptr.hbm [resolvable:$true] %s34
      %s36 = sshll.u32 [#allocation6], 4
      %s37 = int_to_ptr.vmem [resolvable:$true] %s36
      %42 = dma.hbm_to_vmem [thread:$0]  %s35, 3072, %s37, [#allocation7], 64, 64, 4
    $region9: #{tpu_custom_call.1} parent=1 // pred_fallthru
      _
    // Predicated region
    $region10: #{tpu_custom_call.1} parent=1 // pred_check
      _
    $region11: #{tpu_custom_call.1} parent=1 // pred_check_branch
      %44 = sbr.rel (0) target = $region13
    $region12: #{tpu_custom_call.1} parent=1 // pred_region
      %46 = vsyncadd [#allocation7], 0
      %s47 = sshll.u32 %s2, 4
      %s48 = int_to_ptr.hbm [resolvable:$true] %s47
      %s49 = sshll.u32 [#allocation8], 4
      %s50 = int_to_ptr.vmem [resolvable:$true] %s49
      %55 = dma.hbm_to_vmem [thread:$0]  %s48, 3072, %s50, [#allocation7], 64, 64, 4
    $region13: #{tpu_custom_call.1} parent=1 // pred_fallthru
      _
    // Predicated region
    $region14: #{tpu_custom_call.1} parent=1 // pred_check
      _
    $region15: #{tpu_custom_call.1} parent=1 // pred_check_branch
      %57 = sbr.rel (0) target = $region17
    $region16: #{tpu_custom_call.1} parent=1 // pred_region
      %59 = vsyncadd [#allocation10], 0
      %s60 = sshll.u32 %s3, 4
      %s61 = int_to_ptr.hbm [resolvable:$true] %s60
      %s62 = sshll.u32 [#allocation9], 4
      %s63 = int_to_ptr.vmem [resolvable:$true] %s62
      %68 = dma.hbm_to_vmem [thread:$0]  %s61, 2048, %s63, [#allocation10], 128, 128, 8
    $region17: #{tpu_custom_call.1} parent=1 // pred_fallthru
      _
    // Predicated region
    $region18: #{tpu_custom_call.1} parent=1 // pred_check
      _
    $region19: #{tpu_custom_call.1} parent=1 // pred_check_branch
      %70 = sbr.rel (0) target = $region21
    $region20: #{tpu_custom_call.1} parent=1 // pred_region
      _
    $region21: #{tpu_custom_call.1} parent=1 // pred_fallthru
      _
    // Predicated region
    $region22: #{tpu_custom_call.1} parent=1 // pred_check
      _
    $region23: #{tpu_custom_call.1} parent=1 // pred_check_branch
      %72 = sbr.rel (0) target = $region25
    $region24: #{tpu_custom_call.1} parent=1 // pred_region
      _
    $region25: #{tpu_custom_call.1} parent=1 // pred_fallthru
      _
    // Predicated region
    $region26: #{tpu_custom_call.1} parent=1 // pred_check
      _
    $region27: #{tpu_custom_call.1} parent=1 // pred_check_branch
      %74 = sbr.rel (0) target = $region29
    $region28: #{tpu_custom_call.1} parent=1 // pred_region
      _
    $region29: #{tpu_custom_call.1} parent=1 // pred_fallthru
      _
    // Predicated region
    $region30: #{tpu_custom_call.1} parent=1 // pred_check
      _
    $region31: #{tpu_custom_call.1} parent=1 // pred_check_branch
      %76 = sbr.rel (0) target = $region33
    $region32: #{tpu_custom_call.1} parent=1 // pred_region
      _
    $region33: #{tpu_custom_call.1} parent=1 // pred_fallthru
      _
    // Predicated region
    $region34: #{tpu_custom_call.1} parent=1 // pred_check
      _
    $region35: #{tpu_custom_call.1} parent=1 // pred_check_branch
      %78 = sbr.rel (0) target = $region37
    $region36: #{tpu_custom_call.1} parent=1 // pred_region
      %80 = dma.done [#allocation4], 512
    $region37: #{tpu_custom_call.1} parent=1 // pred_fallthru
      _
    // Predicated region
    $region38: #{tpu_custom_call.1} parent=1 // pred_check
      _
    $region39: #{tpu_custom_call.1} parent=1 // pred_check_branch
      %82 = sbr.rel (0) target = $region41
    $region40: #{tpu_custom_call.1} parent=1 // pred_region
      %84 = dma.done [#allocation7], 3072
    $region41: #{tpu_custom_call.1} parent=1 // pred_fallthru
      _
    // Predicated region
    $region42: #{tpu_custom_call.1} parent=1 // pred_check
      _
    $region43: #{tpu_custom_call.1} parent=1 // pred_check_branch
      %86 = sbr.rel (0) target = $region45
    $region44: #{tpu_custom_call.1} parent=1 // pred_region
      %88 = dma.done [#allocation7], 3072
    $region45: #{tpu_custom_call.1} parent=1 // pred_fallthru
      _
    // Predicated region
    $region46: #{tpu_custom_call.1} parent=1 // pred_check
      _
    $region47: #{tpu_custom_call.1} parent=1 // pred_check_branch
      %90 = sbr.rel (0) target = $region49
    $region48: #{tpu_custom_call.1} parent=1 // pred_region
      %92 = dma.done [#allocation10], 2048
    $region49: #{tpu_custom_call.1} parent=1 // pred_fallthru
      _
    %v93 = vld [vmem:[#allocation3] sm:$0xff]
    %v94 = vld [vmem:[#allocation3 + $0x8] sm:$0xff]
    %v95 = vld [vmem:[#allocation3 + $0x10] sm:$0xff]
    %v96 = vld [vmem:[#allocation3 + $0x18] sm:$0xff]
    %97 = vst [vmem:[#allocation2] sm:$0x1] 0.0
    %98 = vst [vmem:[#allocation2 + $0x18] sm:$0x1] 0.0
    %99 = vst [vmem:[#allocation2 + $0x11] sm:$0x1] 0.0
    %100 = vst [vmem:[#allocation2 + $0x29] sm:$0x1] 0.0
    %v101 = vld [vmem:[%s4] sm:$0x1]
    %v102 = vld [vmem:[%s5] sm:$0x1]
    %v103 = vadd.f32 %v93, %v94
    %v104 = vadd.f32 %v103, %v95
    %v105 = vadd.f32 %v104, %v96
    %v106 = vrot.slane %v105, 4
    %v107 = vadd.f32 %v105, %v106
    %v108 = vrot.slane %v107, 2
    %v109 = vadd.f32 %v107, %v108
    %v110 = vrot.slane %v109, 1
    %v111 = vadd.f32 %v109, %v110
    %v112 = vmul.f32 %v93, %v93
    %v113 = vmul.f32 %v94, %v94
    %v114 = vmul.f32 %v95, %v95
    %v115 = vmul.f32 %v96, %v96
    %v116 = vadd.f32 %v112, %v113
    %v117 = vadd.f32 %v116, %v114
    %v118 = vadd.f32 %v117, %v115
    %v119 = vrot.slane %v118, 4
    %v120 = vadd.f32 %v118, %v119
    %v121 = vrot.slane %v120, 2
    %v122 = vadd.f32 %v120, %v121
    %v123 = vrot.slane %v122, 1
    %v124 = vadd.f32 %v122, %v123
    %v125 = vld [vmem:[#allocation9] sm:$0xff]
    %v126 = vld [vmem:[#allocation9 + $0x8] sm:$0xff]
    %v127 = vld [vmem:[#allocation9 + $0x10] sm:$0xff]
    %v128 = vld [vmem:[#allocation9 + $0x18] sm:$0xff]
    %v129 = vld [vmem:[#allocation9 + $0x20] sm:$0xff]
    %v130 = vld [vmem:[#allocation9 + $0x28] sm:$0xff]
    %v131 = vld [vmem:[#allocation9 + $0x30] sm:$0xff]
    %v132 = vld [vmem:[#allocation9 + $0x38] sm:$0xff]
    %v133 = vld [vmem:[#allocation9 + $0x40] sm:$0xff]
    %v134 = vld [vmem:[#allocation9 + $0x48] sm:$0xff]
    %v135 = vld [vmem:[#allocation9 + $0x50] sm:$0xff]
    %v136 = vld [vmem:[#allocation9 + $0x58] sm:$0xff]
    %v137 = vld [vmem:[#allocation9 + $0x60] sm:$0xff]
    %v138 = vld [vmem:[#allocation9 + $0x68] sm:$0xff]
    %v139 = vld [vmem:[#allocation9 + $0x70] sm:$0xff]
    %v140 = vld [vmem:[#allocation9 + $0x78] sm:$0xff]
    %141 = vmatpush.msra.mxu0 %v140
    %142 = vmatpush.msra.mxu0 %v139
    %143 = vmatpush.msra.mxu0 %v138
    %144 = vmatpush.msra.mxu0 %v137
    %145 = vmatpush.msra.mxu0 %v136
    %146 = vmatpush.msra.mxu0 %v135
    %147 = vmatpush.msra.mxu0 %v134
    %148 = vmatpush.msra.mxu0 %v133
    %149 = vmatpush.msra.mxu0 %v132
    %150 = vmatpush.msra.mxu0 %v131
    %151 = vmatpush.msra.mxu0 %v130
    %152 = vmatpush.msra.mxu0 %v129
    %153 = vmatpush.msra.mxu0 %v128
    %154 = vmatpush.msra.mxu0 %v127
    %155 = vmatpush.msra.mxu0 %v126
    %156 = vmatpush.msra.mxu0 %v125
    %157 = vmatmul.f32.gmra.mxu0 %v111
    %v158 = vpop.f32.mrf.mxu0
    %v159 = vadd.f32 0.0, %v158
    %160 = vdwg.mxu0
    %161 = vmatpush.msra.mxu0 %v140
    %162 = vmatpush.msra.mxu0 %v139
    %163 = vmatpush.msra.mxu0 %v138
    %164 = vmatpush.msra.mxu0 %v137
    %165 = vmatpush.msra.mxu0 %v136
    %166 = vmatpush.msra.mxu0 %v135
    %167 = vmatpush.msra.mxu0 %v134
    %168 = vmatpush.msra.mxu0 %v133
    %169 = vmatpush.msra.mxu0 %v132
    %170 = vmatpush.msra.mxu0 %v131
    %171 = vmatpush.msra.mxu0 %v130
    %172 = vmatpush.msra.mxu0 %v129
    %173 = vmatpush.msra.mxu0 %v128
    %174 = vmatpush.msra.mxu0 %v127
    %175 = vmatpush.msra.mxu0 %v126
    %176 = vmatpush.msra.mxu0 %v125
    %177 = vmatmul.f32.gmra.mxu0 %v124
    %v178 = vpop.f32.mrf.mxu0
    %v179 = vadd.f32 0.0, %v178
    %180 = vdwg.mxu0
    %v181 = vmul.f32 %v159, %v159
    %v182 = vsub.f32 %v179, %v181
    %v183 = vadd.f32 %v182, 1e-05
    %v184 = vrsqrt.pop %v183
    %v185 = vmul.f32 %v184, %v183
    %v186 = vmul.f32 %v185, %v184
    %v187 = vmul.f32 0.5, %v186
    %v188 = vsub.f32 1.5, %v187
    %v189 = vmul.f32 %v184, %v188
    %vm190 = vweird.f32 %v183
    %vm191 = vweird.f32 %v184
    %vm192 = vmor %vm190, %vm191
    %v193 = vsel %vm192, %v184, %v189
    %v194 = vmul.f32 %v101, %v193
    %v195 = vmul.f32 %v159, %v194
    %v196 = vsub.f32 %v102, %v195
    %v198 = vperm.slane %v194, 0
    %v200 = vmul.f32 %v93, %v198
    %v201 = vmul.f32 %v94, %v198
    %v202 = vmul.f32 %v95, %v198
    %v203 = vmul.f32 %v96, %v198
    %v205 = vperm.slane %v196, 0
    %v207 = vadd.f32 %v200, %v205
    %v208 = vadd.f32 %v201, %v205
    %v209 = vadd.f32 %v202, %v205
    %v210 = vadd.f32 %v203, %v205
    %v211 = vmax.f32 %v207, 0.0
    %v212 = vmax.f32 %v208, 0.0
    %v213 = vmax.f32 %v209, 0.0
    %v214 = vmax.f32 %v210, 0.0
    %215 = vst [vmem:[#allocation2 + $0x1] sm:$0xff] %v211
    %216 = vst [vmem:[#allocation2 + $0x9] sm:$0xff] %v212
    %217 = vst [vmem:[#allocation2 + $0x19] sm:$0xff] %v213
    %218 = vst [vmem:[#allocation2 + $0x21] sm:$0xff] %v214
    %v219 = vld [vmem:[#allocation2] sm:$0xff]
    %v220 = vld [vmem:[#allocation2 + $0x8] sm:$0xff]
    %v221 = vld [vmem:[#allocation2 + $0x18] sm:$0xff]
    %v222 = vld [vmem:[#allocation2 + $0x20] sm:$0xff]
    %v223 = vpack.c.bf16 %v220, %v219
    %v224 = vpack.c.bf16 %v222, %v221
    %v225 = vld [vmem:[#allocation6] sm:$0xf]
    %v226 = vld [vmem:[#allocation6 + $0x4] sm:$0xf]
    %v227 = vld [vmem:[#allocation6 + $0x8] sm:$0xf]
    %v228 = vld [vmem:[#allocation6 + $0xc] sm:$0xf]
    %v229 = vld [vmem:[#allocation6 + $0x10] sm:$0xf]
    %v230 = vld [vmem:[#allocation6 + $0x14] sm:$0xf]
    %v231 = vld [vmem:[#allocation6 + $0x18] sm:$0xf]
    %v232 = vld [vmem:[#allocation6 + $0x1c] sm:$0xf]
    %v233 = vld [vmem:[#allocation6 + $0x20] sm:$0xf]
    %v234 = vld [vmem:[#allocation6 + $0x24] sm:$0xf]
    %v235 = vld [vmem:[#allocation6 + $0x28] sm:$0xf]
    %v236 = vld [vmem:[#allocation6 + $0x2c] sm:$0xf]
    %v237 = vld [vmem:[#allocation6 + $0x30] sm:$0xf]
    %v238 = vld [vmem:[#allocation6 + $0x34] sm:$0xf]
    %v239 = vld [vmem:[#allocation6 + $0x38] sm:$0xf]
    %v240 = vld [vmem:[#allocation6 + $0x3c] sm:$0xf]
    %v241 = vld [vmem:[#allocation2 + $0x1] sm:$0xff]
    %v242 = vld [vmem:[#allocation2 + $0x9] sm:$0xff]
    %v243 = vld [vmem:[#allocation2 + $0x19] sm:$0xff]
    %v244 = vld [vmem:[#allocation2 + $0x21] sm:$0xff]
    %v245 = vpack.c.bf16 %v242, %v241
    %v246 = vpack.c.bf16 %v244, %v243
    %s247 = scalar_lea.vmem [#allocation6], 64
    %v248 = vld [vmem:[%s247] sm:$0xf]
    %v249 = vld [vmem:[%s247 + $0x4] sm:$0xf]
    %v250 = vld [vmem:[%s247 + $0x8] sm:$0xf]
    %v251 = vld [vmem:[%s247 + $0xc] sm:$0xf]
    %v252 = vld [vmem:[%s247 + $0x10] sm:$0xf]
    %v253 = vld [vmem:[%s247 + $0x14] sm:$0xf]
    %v254 = vld [vmem:[%s247 + $0x18] sm:$0xf]
    %v255 = vld [vmem:[%s247 + $0x1c] sm:$0xf]
    %v256 = vld [vmem:[%s247 + $0x20] sm:$0xf]
    %v257 = vld [vmem:[%s247 + $0x24] sm:$0xf]
    %v258 = vld [vmem:[%s247 + $0x28] sm:$0xf]
    %v259 = vld [vmem:[%s247 + $0x2c] sm:$0xf]
    %v260 = vld [vmem:[%s247 + $0x30] sm:$0xf]
    %v261 = vld [vmem:[%s247 + $0x34] sm:$0xf]
    %v262 = vld [vmem:[%s247 + $0x38] sm:$0xf]
    %v263 = vld [vmem:[%s247 + $0x3c] sm:$0xf]
    %v280 = vunpack.c.l.b16 %v248
    %v281 = vunpack.c.l.b16 %v249
    %v282 = vunpack.c.l.b16 %v250
    %v283 = vunpack.c.l.b16 %v251
    %v284 = vunpack.c.l.b16 %v252
    %v285 = vunpack.c.l.b16 %v253
    %v286 = vunpack.c.l.b16 %v254
    %v287 = vunpack.c.l.b16 %v255
    %v288 = vunpack.c.l.b16 %v256
    %v289 = vunpack.c.l.b16 %v257
    %v290 = vunpack.c.l.b16 %v258
    %v291 = vunpack.c.l.b16 %v259
    %v292 = vunpack.c.l.b16 %v260
    %v293 = vunpack.c.l.b16 %v261
    %v294 = vunpack.c.l.b16 %v262
    %v295 = vunpack.c.l.b16 %v263
    %v296 = vpack.c.b16 %v281, %v280
    %v297 = vpack.c.b16 %v283, %v282
    %v298 = vpack.c.b16 %v285, %v284
    %v299 = vpack.c.b16 %v287, %v286
    %v300 = vpack.c.b16 %v289, %v288
    %v301 = vpack.c.b16 %v291, %v290
    %v302 = vpack.c.b16 %v293, %v292
    %v303 = vpack.c.b16 %v295, %v294
    %312 = vmatpush.bf16.msra.mxu0 %v303
    %313 = vmatpush.bf16.msra.mxu0 %v302
    %314 = vmatpush.bf16.msra.mxu0 %v301
    %315 = vmatpush.bf16.msra.mxu0 %v300
    %316 = vmatpush.bf16.msra.mxu0 %v299
    %317 = vmatpush.bf16.msra.mxu0 %v298
    %318 = vmatpush.bf16.msra.mxu0 %v297
    %319 = vmatpush.bf16.msra.mxu0 %v296
    %320 = vmatmul.bf16.gmra.mxu0 %v245
    %v321 = vpop.f32.mrf.mxu0
    %v322 = vadd.f32 0.0, %v321
    %v323 = vpop.f32.mrf.mxu0
    %v324 = vadd.f32 0.0, %v323
    %325 = vmatmul.bf16.gmra.mxu0 %v246
    %v326 = vpop.f32.mrf.mxu0
    %v327 = vadd.f32 0.0, %v326
    %v328 = vpop.f32.mrf.mxu0
    %v329 = vadd.f32 0.0, %v328
    %330 = vdwg.mxu0
    %v347 = vunpack.c.l.b16 %v225
    %v348 = vunpack.c.l.b16 %v226
    %v349 = vunpack.c.l.b16 %v227
    %v350 = vunpack.c.l.b16 %v228
    %v351 = vunpack.c.l.b16 %v229
    %v352 = vunpack.c.l.b16 %v230
    %v353 = vunpack.c.l.b16 %v231
    %v354 = vunpack.c.l.b16 %v232
    %v355 = vunpack.c.l.b16 %v233
    %v356 = vunpack.c.l.b16 %v234
    %v357 = vunpack.c.l.b16 %v235
    %v358 = vunpack.c.l.b16 %v236
    %v359 = vunpack.c.l.b16 %v237
    %v360 = vunpack.c.l.b16 %v238
    %v361 = vunpack.c.l.b16 %v239
    %v362 = vunpack.c.l.b16 %v240
    %v363 = vpack.c.b16 %v348, %v347
    %v364 = vpack.c.b16 %v350, %v349
    %v365 = vpack.c.b16 %v352, %v351
    %v366 = vpack.c.b16 %v354, %v353
    %v367 = vpack.c.b16 %v356, %v355
    %v368 = vpack.c.b16 %v358, %v357
    %v369 = vpack.c.b16 %v360, %v359
    %v370 = vpack.c.b16 %v362, %v361
    %379 = vmatpush.bf16.msra.mxu0 %v370
    %380 = vmatpush.bf16.msra.mxu0 %v369
    %381 = vmatpush.bf16.msra.mxu0 %v368
    %382 = vmatpush.bf16.msra.mxu0 %v367
    %383 = vmatpush.bf16.msra.mxu0 %v366
    %384 = vmatpush.bf16.msra.mxu0 %v365
    %385 = vmatpush.bf16.msra.mxu0 %v364
    %386 = vmatpush.bf16.msra.mxu0 %v363
    %387 = vmatmul.bf16.gmra.mxu0 %v223
    %v388 = vpop.f32.mrf.mxu0
    %v389 = vadd.f32 %v322, %v388
    %v390 = vpop.f32.mrf.mxu0
    %v391 = vadd.f32 %v324, %v390
    %392 = vmatmul.bf16.gmra.mxu0 %v224
    %v393 = vpop.f32.mrf.mxu0
    %v394 = vadd.f32 %v327, %v393
    %v395 = vpop.f32.mrf.mxu0
    %v396 = vadd.f32 %v329, %v395
    %397 = vdwg.mxu0
    %v398 = vld [vmem:[#allocation2 + $0x2] sm:$0xff]
    %v399 = vld [vmem:[#allocation2 + $0xa] sm:$0xff]
    %v400 = vld [vmem:[#allocation2 + $0x1a] sm:$0xff]
    %v401 = vld [vmem:[#allocation2 + $0x22] sm:$0xff]
    %v402 = vpack.c.bf16 %v399, %v398
    %v403 = vpack.c.bf16 %v401, %v400
    %s404 = scalar_lea.vmem [#allocation6], 128
    %v405 = vld [vmem:[%s404] sm:$0xf]
    %v406 = vld [vmem:[%s404 + $0x4] sm:$0xf]
    %v407 = vld [vmem:[%s404 + $0x8] sm:$0xf]
    %v408 = vld [vmem:[%s404 + $0xc] sm:$0xf]
    %v409 = vld [vmem:[%s404 + $0x10] sm:$0xf]
    %v410 = vld [vmem:[%s404 + $0x14] sm:$0xf]
    %v411 = vld [vmem:[%s404 + $0x18] sm:$0xf]
    %v412 = vld [vmem:[%s404 + $0x1c] sm:$0xf]
    %v413 = vld [vmem:[%s404 + $0x20] sm:$0xf]
    %v414 = vld [vmem:[%s404 + $0x24] sm:$0xf]
    %v415 = vld [vmem:[%s404 + $0x28] sm:$0xf]
    %v416 = vld [vmem:[%s404 + $0x2c] sm:$0xf]
    %v417 = vld [vmem:[%s404 + $0x30] sm:$0xf]
    %v418 = vld [vmem:[%s404 + $0x34] sm:$0xf]
    %v419 = vld [vmem:[%s404 + $0x38] sm:$0xf]
    %v420 = vld [vmem:[%s404 + $0x3c] sm:$0xf]
    %v437 = vunpack.c.l.b16 %v405
    %v438 = vunpack.c.l.b16 %v406
    %v439 = vunpack.c.l.b16 %v407
    %v440 = vunpack.c.l.b16 %v408
    %v441 = vunpack.c.l.b16 %v409
    %v442 = vunpack.c.l.b16 %v410
    %v443 = vunpack.c.l.b16 %v411
    %v444 = vunpack.c.l.b16 %v412
    %v445 = vunpack.c.l.b16 %v413
    %v446 = vunpack.c.l.b16 %v414
    %v447 = vunpack.c.l.b16 %v415
    %v448 = vunpack.c.l.b16 %v416
    %v449 = vunpack.c.l.b16 %v417
    %v450 = vunpack.c.l.b16 %v418
    %v451 = vunpack.c.l.b16 %v419
    %v452 = vunpack.c.l.b16 %v420
    %v453 = vpack.c.b16 %v438, %v437
    %v454 = vpack.c.b16 %v440, %v439
    %v455 = vpack.c.b16 %v442, %v441
    %v456 = vpack.c.b16 %v444, %v443
    %v457 = vpack.c.b16 %v446, %v445
    %v458 = vpack.c.b16 %v448, %v447
    %v459 = vpack.c.b16 %v450, %v449
    %v460 = vpack.c.b16 %v452, %v451
    %469 = vmatpush.bf16.msra.mxu0 %v460
    %470 = vmatpush.bf16.msra.mxu0 %v459
    %471 = vmatpush.bf16.msra.mxu0 %v458
    %472 = vmatpush.bf16.msra.mxu0 %v457
    %473 = vmatpush.bf16.msra.mxu0 %v456
    %474 = vmatpush.bf16.msra.mxu0 %v455
    %475 = vmatpush.bf16.msra.mxu0 %v454
    %476 = vmatpush.bf16.msra.mxu0 %v453
    %477 = vmatmul.bf16.gmra.mxu0 %v402
    %v478 = vpop.f32.mrf.mxu0
    %v479 = vadd.f32 0.0, %v478
    %v480 = vpop.f32.mrf.mxu0
    %v481 = vadd.f32 0.0, %v480
    %482 = vmatmul.bf16.gmra.mxu0 %v403
    %v483 = vpop.f32.mrf.mxu0
    %v484 = vadd.f32 0.0, %v483
    %v485 = vpop.f32.mrf.mxu0
    %v486 = vadd.f32 0.0, %v485
    %487 = vdwg.mxu0
    %v488 = vadd.f32 %v389, %v479
    %v489 = vadd.f32 %v391, %v481
    %v490 = vadd.f32 %v394, %v484
    %v491 = vadd.f32 %v396, %v486
    %v492 = vld [vmem:[%s6] sm:$0x1]
    %v493 = vld [vmem:[%s7] sm:$0x1]
    %v494 = vadd.f32 %v488, %v489
    %v495 = vadd.f32 %v494, %v490
    %v496 = vadd.f32 %v495, %v491
    %v497 = vrot.slane %v496, 4
    %v498 = vadd.f32 %v496, %v497
    %v499 = vrot.slane %v498, 2
    %v500 = vadd.f32 %v498, %v499
    %v501 = vrot.slane %v500, 1
    %v502 = vadd.f32 %v500, %v501
    %v503 = vmul.f32 %v488, %v488
    %v504 = vmul.f32 %v489, %v489
    %v505 = vmul.f32 %v490, %v490
    %v506 = vmul.f32 %v491, %v491
    %v507 = vadd.f32 %v503, %v504
    %v508 = vadd.f32 %v507, %v505
    %v509 = vadd.f32 %v508, %v506
    %v510 = vrot.slane %v509, 4
    %v511 = vadd.f32 %v509, %v510
    %v512 = vrot.slane %v511, 2
    %v513 = vadd.f32 %v511, %v512
    %v514 = vrot.slane %v513, 1
    %v515 = vadd.f32 %v513, %v514
    %v516 = vld [vmem:[#allocation9] sm:$0xff]
    %v517 = vld [vmem:[#allocation9 + $0x8] sm:$0xff]
    %v518 = vld [vmem:[#allocation9 + $0x10] sm:$0xff]
    %v519 = vld [vmem:[#allocation9 + $0x18] sm:$0xff]
    %v520 = vld [vmem:[#allocation9 + $0x20] sm:$0xff]
    %v521 = vld [vmem:[#allocation9 + $0x28] sm:$0xff]
    %v522 = vld [vmem:[#allocation9 + $0x30] sm:$0xff]
    %v523 = vld [vmem:[#allocation9 + $0x38] sm:$0xff]
    %v524 = vld [vmem:[#allocation9 + $0x40] sm:$0xff]
    %v525 = vld [vmem:[#allocation9 + $0x48] sm:$0xff]
    %v526 = vld [vmem:[#allocation9 + $0x50] sm:$0xff]
    %v527 = vld [vmem:[#allocation9 + $0x58] sm:$0xff]
    %v528 = vld [vmem:[#allocation9 + $0x60] sm:$0xff]
    %v529 = vld [vmem:[#allocation9 + $0x68] sm:$0xff]
    %v530 = vld [vmem:[#allocation9 + $0x70] sm:$0xff]
    %v531 = vld [vmem:[#allocation9 + $0x78] sm:$0xff]
    %532 = vmatpush.msra.mxu0 %v531
    %533 = vmatpush.msra.mxu0 %v530
    %534 = vmatpush.msra.mxu0 %v529
    %535 = vmatpush.msra.mxu0 %v528
    %536 = vmatpush.msra.mxu0 %v527
    %537 = vmatpush.msra.mxu0 %v526
    %538 = vmatpush.msra.mxu0 %v525
    %539 = vmatpush.msra.mxu0 %v524
    %540 = vmatpush.msra.mxu0 %v523
    %541 = vmatpush.msra.mxu0 %v522
    %542 = vmatpush.msra.mxu0 %v521
    %543 = vmatpush.msra.mxu0 %v520
    %544 = vmatpush.msra.mxu0 %v519
    %545 = vmatpush.msra.mxu0 %v518
    %546 = vmatpush.msra.mxu0 %v517
    %547 = vmatpush.msra.mxu0 %v516
    %548 = vmatmul.f32.gmra.mxu0 %v502
    %v549 = vpop.f32.mrf.mxu0
    %v550 = vadd.f32 0.0, %v549
    %551 = vdwg.mxu0
    %552 = vmatpush.msra.mxu0 %v531
    %553 = vmatpush.msra.mxu0 %v530
    %554 = vmatpush.msra.mxu0 %v529
    %555 = vmatpush.msra.mxu0 %v528
    %556 = vmatpush.msra.mxu0 %v527
    %557 = vmatpush.msra.mxu0 %v526
    %558 = vmatpush.msra.mxu0 %v525
    %559 = vmatpush.msra.mxu0 %v524
    %560 = vmatpush.msra.mxu0 %v523
    %561 = vmatpush.msra.mxu0 %v522
    %562 = vmatpush.msra.mxu0 %v521
    %563 = vmatpush.msra.mxu0 %v520
    %564 = vmatpush.msra.mxu0 %v519
    %565 = vmatpush.msra.mxu0 %v518
    %566 = vmatpush.msra.mxu0 %v517
    %567 = vmatpush.msra.mxu0 %v516
    %568 = vmatmul.f32.gmra.mxu0 %v515
    %v569 = vpop.f32.mrf.mxu0
    %v570 = vadd.f32 0.0, %v569
    %571 = vdwg.mxu0
    %v572 = vmul.f32 %v550, %v550
    %v573 = vsub.f32 %v570, %v572
    %v574 = vadd.f32 %v573, 1e-05
    %v575 = vrsqrt.pop %v574
    %v576 = vmul.f32 %v575, %v574
    %v577 = vmul.f32 %v576, %v575
    %v578 = vmul.f32 0.5, %v577
    %v579 = vsub.f32 1.5, %v578
    %v580 = vmul.f32 %v575, %v579
    %vm581 = vweird.f32 %v574
    %vm582 = vweird.f32 %v575
    %vm583 = vmor %vm581, %vm582
    %v584 = vsel %vm583, %v575, %v580
    %v585 = vmul.f32 %v492, %v584
    %v586 = vmul.f32 %v550, %v585
    %v587 = vsub.f32 %v493, %v586
    %v589 = vperm.slane %v585, 0
    %v591 = vmul.f32 %v488, %v589
    %v592 = vmul.f32 %v489, %v589
    %v593 = vmul.f32 %v490, %v589
    %v594 = vmul.f32 %v491, %v589
    %v596 = vperm.slane %v587, 0
    %v598 = vadd.f32 %v591, %v596
    %v599 = vadd.f32 %v592, %v596
    %v600 = vadd.f32 %v593, %v596
    %v601 = vadd.f32 %v594, %v596
    %v602 = vmax.f32 %v598, 0.0
    %v603 = vmax.f32 %v599, 0.0
    %v604 = vmax.f32 %v600, 0.0
    %v605 = vmax.f32 %v601, 0.0
    %606 = vst [vmem:[#allocation2 + $0x1] sm:$0xff] %v602
    %607 = vst [vmem:[#allocation2 + $0x9] sm:$0xff] %v603
    %608 = vst [vmem:[#allocation2 + $0x19] sm:$0xff] %v604
    %609 = vst [vmem:[#allocation2 + $0x21] sm:$0xff] %v605
    %v610 = vld [vmem:[#allocation2] sm:$0xff]
    %v611 = vld [vmem:[#allocation2 + $0x8] sm:$0xff]
    %v612 = vld [vmem:[#allocation2 + $0x18] sm:$0xff]
    %v613 = vld [vmem:[#allocation2 + $0x20] sm:$0xff]
    %v614 = vpack.c.bf16 %v611, %v610
    %v615 = vpack.c.bf16 %v613, %v612
    %v616 = vld [vmem:[#allocation8] sm:$0xf]
    %v617 = vld [vmem:[#allocation8 + $0x4] sm:$0xf]
    %v618 = vld [vmem:[#allocation8 + $0x8] sm:$0xf]
    %v619 = vld [vmem:[#allocation8 + $0xc] sm:$0xf]
    %v620 = vld [vmem:[#allocation8 + $0x10] sm:$0xf]
    %v621 = vld [vmem:[#allocation8 + $0x14] sm:$0xf]
    %v622 = vld [vmem:[#allocation8 + $0x18] sm:$0xf]
    %v623 = vld [vmem:[#allocation8 + $0x1c] sm:$0xf]
    %v624 = vld [vmem:[#allocation8 + $0x20] sm:$0xf]
    %v625 = vld [vmem:[#allocation8 + $0x24] sm:$0xf]
    %v626 = vld [vmem:[#allocation8 + $0x28] sm:$0xf]
    %v627 = vld [vmem:[#allocation8 + $0x2c] sm:$0xf]
    %v628 = vld [vmem:[#allocation8 + $0x30] sm:$0xf]
    %v629 = vld [vmem:[#allocation8 + $0x34] sm:$0xf]
    %v630 = vld [vmem:[#allocation8 + $0x38] sm:$0xf]
    %v631 = vld [vmem:[#allocation8 + $0x3c] sm:$0xf]
    %v632 = vld [vmem:[#allocation2 + $0x1] sm:$0xff]
    %v633 = vld [vmem:[#allocation2 + $0x9] sm:$0xff]
    %v634 = vld [vmem:[#allocation2 + $0x19] sm:$0xff]
    %v635 = vld [vmem:[#allocation2 + $0x21] sm:$0xff]
    %v636 = vpack.c.bf16 %v633, %v632
    %v637 = vpack.c.bf16 %v635, %v634
    %s638 = scalar_lea.vmem [#allocation8], 64
    %v639 = vld [vmem:[%s638] sm:$0xf]
    %v640 = vld [vmem:[%s638 + $0x4] sm:$0xf]
    %v641 = vld [vmem:[%s638 + $0x8] sm:$0xf]
    %v642 = vld [vmem:[%s638 + $0xc] sm:$0xf]
    %v643 = vld [vmem:[%s638 + $0x10] sm:$0xf]
    %v644 = vld [vmem:[%s638 + $0x14] sm:$0xf]
    %v645 = vld [vmem:[%s638 + $0x18] sm:$0xf]
    %v646 = vld [vmem:[%s638 + $0x1c] sm:$0xf]
    %v647 = vld [vmem:[%s638 + $0x20] sm:$0xf]
    %v648 = vld [vmem:[%s638 + $0x24] sm:$0xf]
    %v649 = vld [vmem:[%s638 + $0x28] sm:$0xf]
    %v650 = vld [vmem:[%s638 + $0x2c] sm:$0xf]
    %v651 = vld [vmem:[%s638 + $0x30] sm:$0xf]
    %v652 = vld [vmem:[%s638 + $0x34] sm:$0xf]
    %v653 = vld [vmem:[%s638 + $0x38] sm:$0xf]
    %v654 = vld [vmem:[%s638 + $0x3c] sm:$0xf]
    %v671 = vunpack.c.l.b16 %v639
    %v672 = vunpack.c.l.b16 %v640
    %v673 = vunpack.c.l.b16 %v641
    %v674 = vunpack.c.l.b16 %v642
    %v675 = vunpack.c.l.b16 %v643
    %v676 = vunpack.c.l.b16 %v644
    %v677 = vunpack.c.l.b16 %v645
    %v678 = vunpack.c.l.b16 %v646
    %v679 = vunpack.c.l.b16 %v647
    %v680 = vunpack.c.l.b16 %v648
    %v681 = vunpack.c.l.b16 %v649
    %v682 = vunpack.c.l.b16 %v650
    %v683 = vunpack.c.l.b16 %v651
    %v684 = vunpack.c.l.b16 %v652
    %v685 = vunpack.c.l.b16 %v653
    %v686 = vunpack.c.l.b16 %v654
    %v687 = vpack.c.b16 %v672, %v671
    %v688 = vpack.c.b16 %v674, %v673
    %v689 = vpack.c.b16 %v676, %v675
    %v690 = vpack.c.b16 %v678, %v677
    %v691 = vpack.c.b16 %v680, %v679
    %v692 = vpack.c.b16 %v682, %v681
    %v693 = vpack.c.b16 %v684, %v683
    %v694 = vpack.c.b16 %v686, %v685
    %703 = vmatpush.bf16.msra.mxu0 %v694
    %704 = vmatpush.bf16.msra.mxu0 %v693
    %705 = vmatpush.bf16.msra.mxu0 %v692
    %706 = vmatpush.bf16.msra.mxu0 %v691
    %707 = vmatpush.bf16.msra.mxu0 %v690
    %708 = vmatpush.bf16.msra.mxu0 %v689
    %709 = vmatpush.bf16.msra.mxu0 %v688
    %710 = vmatpush.bf16.msra.mxu0 %v687
    %711 = vmatmul.bf16.gmra.mxu0 %v636
    %v712 = vpop.f32.mrf.mxu0
    %v713 = vadd.f32 0.0, %v712
    %v714 = vpop.f32.mrf.mxu0
    %v715 = vadd.f32 0.0, %v714
    %716 = vmatmul.bf16.gmra.mxu0 %v637
    %v717 = vpop.f32.mrf.mxu0
    %v718 = vadd.f32 0.0, %v717
    %v719 = vpop.f32.mrf.mxu0
    %v720 = vadd.f32 0.0, %v719
    %721 = vdwg.mxu0
    %v738 = vunpack.c.l.b16 %v616
    %v739 = vunpack.c.l.b16 %v617
    %v740 = vunpack.c.l.b16 %v618
    %v741 = vunpack.c.l.b16 %v619
    %v742 = vunpack.c.l.b16 %v620
    %v743 = vunpack.c.l.b16 %v621
    %v744 = vunpack.c.l.b16 %v622
    %v745 = vunpack.c.l.b16 %v623
    %v746 = vunpack.c.l.b16 %v624
    %v747 = vunpack.c.l.b16 %v625
    %v748 = vunpack.c.l.b16 %v626
    %v749 = vunpack.c.l.b16 %v627
    %v750 = vunpack.c.l.b16 %v628
    %v751 = vunpack.c.l.b16 %v629
    %v752 = vunpack.c.l.b16 %v630
    %v753 = vunpack.c.l.b16 %v631
    %v754 = vpack.c.b16 %v739, %v738
    %v755 = vpack.c.b16 %v741, %v740
    %v756 = vpack.c.b16 %v743, %v742
    %v757 = vpack.c.b16 %v745, %v744
    %v758 = vpack.c.b16 %v747, %v746
    %v759 = vpack.c.b16 %v749, %v748
    %v760 = vpack.c.b16 %v751, %v750
    %v761 = vpack.c.b16 %v753, %v752
    %770 = vmatpush.bf16.msra.mxu0 %v761
    %771 = vmatpush.bf16.msra.mxu0 %v760
    %772 = vmatpush.bf16.msra.mxu0 %v759
    %773 = vmatpush.bf16.msra.mxu0 %v758
    %774 = vmatpush.bf16.msra.mxu0 %v757
    %775 = vmatpush.bf16.msra.mxu0 %v756
    %776 = vmatpush.bf16.msra.mxu0 %v755
    %777 = vmatpush.bf16.msra.mxu0 %v754
    %778 = vmatmul.bf16.gmra.mxu0 %v614
    %v779 = vpop.f32.mrf.mxu0
    %v780 = vadd.f32 %v713, %v779
    %v781 = vpop.f32.mrf.mxu0
    %v782 = vadd.f32 %v715, %v781
    %783 = vmatmul.bf16.gmra.mxu0 %v615
    %v784 = vpop.f32.mrf.mxu0
    %v785 = vadd.f32 %v718, %v784
    %v786 = vpop.f32.mrf.mxu0
    %v787 = vadd.f32 %v720, %v786
    %788 = vdwg.mxu0
    %v789 = vld [vmem:[#allocation2 + $0x2] sm:$0xff]
    %v790 = vld [vmem:[#allocation2 + $0xa] sm:$0xff]
    %v791 = vld [vmem:[#allocation2 + $0x1a] sm:$0xff]
    %v792 = vld [vmem:[#allocation2 + $0x22] sm:$0xff]
    %v793 = vpack.c.bf16 %v790, %v789
    %v794 = vpack.c.bf16 %v792, %v791
    %s795 = scalar_lea.vmem [#allocation8], 128
    %v796 = vld [vmem:[%s795] sm:$0xf]
    %v797 = vld [vmem:[%s795 + $0x4] sm:$0xf]
    %v798 = vld [vmem:[%s795 + $0x8] sm:$0xf]
    %v799 = vld [vmem:[%s795 + $0xc] sm:$0xf]
    %v800 = vld [vmem:[%s795 + $0x10] sm:$0xf]
    %v801 = vld [vmem:[%s795 + $0x14] sm:$0xf]
    %v802 = vld [vmem:[%s795 + $0x18] sm:$0xf]
    %v803 = vld [vmem:[%s795 + $0x1c] sm:$0xf]
    %v804 = vld [vmem:[%s795 + $0x20] sm:$0xf]
    %v805 = vld [vmem:[%s795 + $0x24] sm:$0xf]
    %v806 = vld [vmem:[%s795 + $0x28] sm:$0xf]
    %v807 = vld [vmem:[%s795 + $0x2c] sm:$0xf]
    %v808 = vld [vmem:[%s795 + $0x30] sm:$0xf]
    %v809 = vld [vmem:[%s795 + $0x34] sm:$0xf]
    %v810 = vld [vmem:[%s795 + $0x38] sm:$0xf]
    %v811 = vld [vmem:[%s795 + $0x3c] sm:$0xf]
    %v828 = vunpack.c.l.b16 %v796
    %v829 = vunpack.c.l.b16 %v797
    %v830 = vunpack.c.l.b16 %v798
    %v831 = vunpack.c.l.b16 %v799
    %v832 = vunpack.c.l.b16 %v800
    %v833 = vunpack.c.l.b16 %v801
    %v834 = vunpack.c.l.b16 %v802
    %v835 = vunpack.c.l.b16 %v803
    %v836 = vunpack.c.l.b16 %v804
    %v837 = vunpack.c.l.b16 %v805
    %v838 = vunpack.c.l.b16 %v806
    %v839 = vunpack.c.l.b16 %v807
    %v840 = vunpack.c.l.b16 %v808
    %v841 = vunpack.c.l.b16 %v809
    %v842 = vunpack.c.l.b16 %v810
    %v843 = vunpack.c.l.b16 %v811
    %v844 = vpack.c.b16 %v829, %v828
    %v845 = vpack.c.b16 %v831, %v830
    %v846 = vpack.c.b16 %v833, %v832
    %v847 = vpack.c.b16 %v835, %v834
    %v848 = vpack.c.b16 %v837, %v836
    %v849 = vpack.c.b16 %v839, %v838
    %v850 = vpack.c.b16 %v841, %v840
    %v851 = vpack.c.b16 %v843, %v842
    %860 = vmatpush.bf16.msra.mxu0 %v851
    %861 = vmatpush.bf16.msra.mxu0 %v850
    %862 = vmatpush.bf16.msra.mxu0 %v849
    %863 = vmatpush.bf16.msra.mxu0 %v848
    %864 = vmatpush.bf16.msra.mxu0 %v847
    %865 = vmatpush.bf16.msra.mxu0 %v846
    %866 = vmatpush.bf16.msra.mxu0 %v845
    %867 = vmatpush.bf16.msra.mxu0 %v844
    %868 = vmatmul.bf16.gmra.mxu0 %v793
    %v869 = vpop.f32.mrf.mxu0
    %v870 = vadd.f32 0.0, %v869
    %v871 = vpop.f32.mrf.mxu0
    %v872 = vadd.f32 0.0, %v871
    %873 = vmatmul.bf16.gmra.mxu0 %v794
    %v874 = vpop.f32.mrf.mxu0
    %v875 = vadd.f32 0.0, %v874
    %v876 = vpop.f32.mrf.mxu0
    %v877 = vadd.f32 0.0, %v876
    %878 = vdwg.mxu0
    %v879 = vadd.f32 %v780, %v870
    %v880 = vadd.f32 %v782, %v872
    %v881 = vadd.f32 %v785, %v875
    %v882 = vadd.f32 %v787, %v877
    %v883 = vadd.f32 %v93, %v879
    %v884 = vadd.f32 %v94, %v880
    %v885 = vadd.f32 %v95, %v881
    %v886 = vadd.f32 %v96, %v882
    %887 = vst [vmem:[#allocation11] sm:$0xff] %v883
    %888 = vst [vmem:[#allocation11 + $0x8] sm:$0xff] %v884
    %889 = vst [vmem:[#allocation11 + $0x10] sm:$0xff] %v885
    %890 = vst [vmem:[#allocation11 + $0x18] sm:$0xff] %v886
    // Predicated region
    $region50: #{tpu_custom_call.1} parent=1 // pred_check
      _
    $region51: #{tpu_custom_call.1} parent=1 // pred_check_branch
      %892 = sbr.rel (0) target = $region53
    $region52: #{tpu_custom_call.1} parent=1 // pred_region
      %894 = vsyncadd [#allocation5], 0
      %s895 = sshll.u32 [#allocation11], 4
      %s896 = int_to_ptr.vmem [resolvable:$true] %s895
      %s897 = sshll.u32 %s8, 4
      %s898 = int_to_ptr.hbm [resolvable:$true] %s897
      %903 = dma.vmem_to_hbm [thread:$0]  %s896, 512, %s898, [#allocation5], 128, 128, 8
    $region53: #{tpu_custom_call.1} parent=1 // pred_fallthru
      _
    // Predicated region
    $region54: #{tpu_custom_call.1} parent=1 // pred_check
      _
    $region55: #{tpu_custom_call.1} parent=1 // pred_check_branch
      %905 = sbr.rel (0) target = $region57
    $region56: #{tpu_custom_call.1} parent=1 // pred_region
      %907 = dma.done [#allocation5], 512
    $region57: #{tpu_custom_call.1} parent=1 // pred_fallthru
      _
    %908 = vsyncpa [#allocation4], 1
    %909 = vsyncpa [#allocation7], 1
    %910 = vsyncpa [#allocation10], 1
    %911 = vsyncpa [#allocation5], 1

</llo_original>
